<compile_context>
chip_gen: v5e
topology: v5e:2x2
jax: 0.10.0
libtpu: 0.0.40
codegen_flags: <defaults>
</compile_context>

<pallas_src>
import jax
import jax.numpy as jnp
from jax.experimental import pallas as pl
from jax.experimental.pallas import tpu as pltpu


def two_stage_kernel(x_ref, w_ds_ref, b_ds_ref, scale_ref, bias_ref, out_ref):
    """Fused stage-1 head -> clamp/*255 bridge -> folded stage-2 head (pure VPU)."""
    x = x_ref[...]                       # (Cin, TILE)
    w = w_ds_ref[...]                    # (4, Cin)   stage-1 1x1-conv weights
    b = b_ds_ref[...]                    # (4, 1)     stage-1 bias

    # ---- stage 1: depth + surface-normal head, unrolled on the VPU ----
    # feats[o, p] = sum_c w[o, c] * x[c, p] + b[o]
    cin = x.shape[0]
    feats = b + w[:, 0:1] * x[0:1, :]    # (4,1)*(1,TILE) -> (4, TILE)
    for c in range(1, cin):
        feats = feats + w[:, c:c + 1] * x[c:c + 1, :]

    depth = feats[0:1, :]                # (1, TILE)  raw depth output
    # (feats[1:4] are the surface normals; they stay packed in `feats`.)

    # ---- TwoStageModel bridge: depth.repeat(1,3,1,1).clamp(min=0) * 255 ----
    d3_row = jnp.maximum(depth, 0.0) * 255.0         # (1, TILE), single channel

    # ---- stage 2 (folded): detectron2 pixel-norm + 1x1 semseg conv ----
    # seg[k, p] = scale[k] * d3_row[p] + bias[k]   (rank-1, precomputed in wrapper)
    seg = scale_ref[...] * d3_row + bias_ref[...]    # (K,1)*(1,TILE)+(K,1) -> (K, TILE)

    # Single lane-dense packed store: rows 0..3 = [depth | sn], rows 4.. = seg.
    out_ref[...] = jnp.concatenate([feats, seg], axis=0)
    # TODO(synk): RCNN instance detection (proposals / ROI heads) and the
    # sem_seg_postprocess / detector_postprocess resizing have no clean Pallas
    # equivalent at this granularity and are omitted.


def two_stage_forward(x, params, tile_lanes=8192):
    """x: (B, Cin, H, W) float32 'rf image'.  Returns (per-image dicts, raw tensors)."""
    B, Cin, H, W = x.shape
    HW = H * W
    K = params["w_seg"].shape[0]
    OUT_C = 4 + K                                     # depth(1) + sn(3) + seg(K)

    # -- fold pixel normalization + stage-2 1x1 conv into rank-1 scale/bias --
    # seg[k] = sum_c w_seg[k,c] * (d3 - mean[c]) / std[c] + b_seg[k]
    #        = d3 * sum_c w_seg[k,c]/std[c]  +  (b_seg[k] - sum_c w_seg[k,c]*mean[c]/std[c])
    inv_std = 1.0 / params["std"][:, 0]                                   # (3,)
    seg_scale = jnp.sum(params["w_seg"] * inv_std[None, :],
                        axis=1, keepdims=True)                            # (K, 1)
    seg_bias = params["b_seg"] - jnp.sum(
        params["w_seg"] * (params["mean"][:, 0] * inv_std)[None, :],
        axis=1, keepdims=True)                                            # (K, 1)

    # -- lane-dense, 128-aligned tiling of the flattened spatial axis --
    hw128 = pl.cdiv(HW, 128) * 128
    TILE = min(hw128, tile_lanes)
    HW_pad = pl.cdiv(HW, TILE) * TILE
    num_tiles = HW_pad // TILE

    xf = x.reshape(B, Cin, HW)
    if HW_pad != HW:
        xf = jnp.pad(xf, ((0, 0), (0, 0), (0, HW_pad - HW)))

    def param_spec(shape):
        # tiny parameter tensors: full block, constant index_map -> resident in VMEM
        return pl.BlockSpec(shape, lambda b, t: (0, 0))

    out = pl.pallas_call(
        two_stage_kernel,
        out_shape=jax.ShapeDtypeStruct((B, OUT_C, HW_pad), jnp.float32),
        grid=(B, num_tiles),
        in_specs=[
            pl.BlockSpec((None, Cin, TILE), lambda b, t: (b, 0, t)),
            param_spec(params["w_ds"].shape),
            param_spec(params["b_ds"].shape),
            param_spec((K, 1)),
            param_spec((K, 1)),
        ],
        out_specs=pl.BlockSpec((None, OUT_C, TILE), lambda b, t: (b, 0, t)),
        compiler_params=pltpu.CompilerParams(
            dimension_semantics=("parallel", "parallel")),
    )(xf, params["w_ds"], params["b_ds"], seg_scale, seg_bias)

    out = out[:, :, :HW]                               # drop lane padding
    depth = out[:, 0:1, :].reshape(B, 1, H, W)
    sn = out[:, 1:4, :].reshape(B, 3, H, W)
    seg = out[:, 4:, :].reshape(B, K, H, W)
    # Bridged image is exactly broadcast(relu(depth)*255); reconstructed here at
    # zero kernel cost instead of writing 3 identical channels from the kernel.
    depth3 = jnp.broadcast_to(jnp.maximum(depth, 0.0) * 255.0, (B, 3, H, W))

    # mirror TwoStageModel._postprocess output structure (output spatial size ==
    # input spatial size here, so no resize is needed)
    results = []
    for i in range(B):
        results.append({
            "depth": depth[i],
            "sn": sn[i],
            "sem_seg": seg[i],
            "instances": None,   # TODO(synk): no Pallas equivalent for RCNN instances
            "image_after_bridge": depth3[i],
        })
    return results, (depth, sn, depth3, seg)


def reference_forward(x, params):
    """Pure-JAX reference for correctness checking."""
    B, Cin, H, W = x.shape
    xf = x.reshape(B, Cin, H * W)
    feats = jnp.einsum("oc,bcp->bop", params["w_ds"], xf) + params["b_ds"][None]
    depth = feats[:, 0:1, :]
    sn = feats[:, 1:4, :]
    depth3 = jnp.broadcast_to(jnp.maximum(depth, 0.0) * 255.0, sn.shape)
    img = (depth3 - params["mean"][None]) / params["std"][None]
    seg = jnp.einsum("kc,bcp->bkp", params["w_seg"], img) + params["b_seg"][None]
    return (depth.reshape(B, 1, H, W), sn.reshape(B, 3, H, W),
            depth3.reshape(B, 3, H, W), seg.reshape(B, -1, H, W))


if __name__ == "__main__":
    B, Cin, H, W = 2, 4, 16, 16
    K = 8  # number of semantic-segmentation classes in the synthetic head

    key = jax.random.PRNGKey(0)
    kx, k1, k2, k3, k4 = jax.random.split(key, 5)

    x = jax.random.normal(kx, (B, Cin, H, W), dtype=jnp.float32)

    params = {
        # stage-1 head: row 0 -> depth, rows 1..3 -> surface normals
        "w_ds": 0.1 * jax.random.normal(k1, (4, Cin), dtype=jnp.float32),
        "b_ds": 0.01 * jax.random.normal(k2, (4, 1), dtype=jnp.float32),
        # detectron2 PIXEL_MEAN / PIXEL_STD set in TwoStageModel.from_config
        "mean": jnp.array([[123.675], [116.28], [103.53]], dtype=jnp.float32),
        "std": jnp.array([[58.395], [57.12], [57.375]], dtype=jnp.float32),
        # stage-2 semseg head (1x1 conv over the 3-channel bridged image)
        "w_seg": 0.1 * jax.random.normal(k3, (K, 3), dtype=jnp.float32),
        "b_seg": 0.01 * jax.random.normal(k4, (K, 1), dtype=jnp.float32),
    }

    results, (depth, sn, depth3, seg) = two_stage_forward(x, params)
    jax.block_until_ready(seg)

    ref_depth, ref_sn, ref_depth3, ref_seg = reference_forward(x, params)
    assert jnp.allclose(depth, ref_depth, atol=1e-4, rtol=1e-4)
    assert jnp.allclose(sn, ref_sn, atol=1e-4, rtol=1e-4)
    assert jnp.allclose(depth3, ref_depth3, atol=1e-3, rtol=1e-4)
    assert jnp.allclose(seg, ref_seg, atol=1e-3, rtol=1e-4)

    print("KERNEL_OK")
</pallas_src>

<mosaic_0001>
module attributes {stable_mosaic.version = 11 : i64} {
  func.func @two_stage_kernel(%arg0: i32, %arg1: i32, %arg2: memref<1x4x256xf32, #tpu.memory_space<vmem>>, %arg3: memref<4x4xf32, #tpu.memory_space<vmem>>, %arg4: memref<4x1xf32, #tpu.memory_space<vmem>>, %arg5: memref<8x1xf32, #tpu.memory_space<vmem>>, %arg6: memref<8x1xf32, #tpu.memory_space<vmem>>, %arg7: memref<1x12x256xf32, #tpu.memory_space<vmem>>) attributes {dimension_semantics = [#tpu.dimension_semantics<parallel>, #tpu.dimension_semantics<parallel>], iteration_bounds = array<i64: 2, 1>, scalar_prefetch = 0 : i64, scratch_operands = 0 : i64, tpu.core_type = #tpu.core_type<tc>, window_params = [{transform_indices = @transform_0, window_bounds = array<i64: 1, 4, 256>}, {pipeline_mode = #tpu.pipeline_mode<synchronous>, transform_indices = @transform_1, window_bounds = array<i64: 4, 4>}, {pipeline_mode = #tpu.pipeline_mode<synchronous>, transform_indices = @transform_2, window_bounds = array<i64: 4, 1>}, {pipeline_mode = #tpu.pipeline_mode<synchronous>, transform_indices = @transform_3, window_bounds = array<i64: 8, 1>}, {pipeline_mode = #tpu.pipeline_mode<synchronous>, transform_indices = @transform_4, window_bounds = array<i64: 8, 1>}, {transform_indices = @transform_5, window_bounds = array<i64: 1, 12, 256>}]} {
    %c0 = arith.constant 0 : index
    %c0_0 = arith.constant 0 : index
    %c0_1 = arith.constant 0 : index
    %0 = vector.load %arg2[%c0, %c0_0, %c0_1] : memref<1x4x256xf32, #tpu.memory_space<vmem>>, vector<1x4x256xf32>
    %1 = vector.shape_cast %0 : vector<1x4x256xf32> to vector<4x256xf32>
    %c0_2 = arith.constant 0 : index
    %c0_3 = arith.constant 0 : index
    %2 = vector.load %arg3[%c0_2, %c0_3] : memref<4x4xf32, #tpu.memory_space<vmem>>, vector<4x4xf32>
    %c0_4 = arith.constant 0 : index
    %c0_5 = arith.constant 0 : index
    %3 = vector.load %arg4[%c0_4, %c0_5] : memref<4x1xf32, #tpu.memory_space<vmem>>, vector<4x1xf32>
    %4 = vector.extract_strided_slice %2 {offsets = [0, 0], sizes = [4, 1], strides = [1, 1]} : vector<4x4xf32> to vector<4x1xf32>
    %5 = vector.extract_strided_slice %1 {offsets = [0, 0], sizes = [1, 256], strides = [1, 1]} : vector<4x256xf32> to vector<1x256xf32>
    %6 = vector.broadcast %4 : vector<4x1xf32> to vector<4x256xf32>
    %7 = vector.broadcast %5 : vector<1x256xf32> to vector<4x256xf32>
    %8 = arith.mulf %6, %7 : vector<4x256xf32>
    %9 = vector.broadcast %3 : vector<4x1xf32> to vector<4x256xf32>
    %10 = arith.addf %9, %8 : vector<4x256xf32>
    %11 = vector.extract_strided_slice %2 {offsets = [0, 1], sizes = [4, 1], strides = [1, 1]} : vector<4x4xf32> to vector<4x1xf32>
    %12 = vector.extract_strided_slice %1 {offsets = [1, 0], sizes = [1, 256], strides = [1, 1]} : vector<4x256xf32> to vector<1x256xf32>
    %13 = vector.broadcast %11 : vector<4x1xf32> to vector<4x256xf32>
    %14 = vector.broadcast %12 : vector<1x256xf32> to vector<4x256xf32>
    %15 = arith.mulf %13, %14 : vector<4x256xf32>
    %16 = arith.addf %10, %15 : vector<4x256xf32>
    %17 = vector.extract_strided_slice %2 {offsets = [0, 2], sizes = [4, 1], strides = [1, 1]} : vector<4x4xf32> to vector<4x1xf32>
    %18 = vector.extract_strided_slice %1 {offsets = [2, 0], sizes = [1, 256], strides = [1, 1]} : vector<4x256xf32> to vector<1x256xf32>
    %19 = vector.broadcast %17 : vector<4x1xf32> to vector<4x256xf32>
    %20 = vector.broadcast %18 : vector<1x256xf32> to vector<4x256xf32>
    %21 = arith.mulf %19, %20 : vector<4x256xf32>
    %22 = arith.addf %16, %21 : vector<4x256xf32>
    %23 = vector.extract_strided_slice %2 {offsets = [0, 3], sizes = [4, 1], strides = [1, 1]} : vector<4x4xf32> to vector<4x1xf32>
    %24 = vector.extract_strided_slice %1 {offsets = [3, 0], sizes = [1, 256], strides = [1, 1]} : vector<4x256xf32> to vector<1x256xf32>
    %25 = vector.broadcast %23 : vector<4x1xf32> to vector<4x256xf32>
    %26 = vector.broadcast %24 : vector<1x256xf32> to vector<4x256xf32>
    %27 = arith.mulf %25, %26 : vector<4x256xf32>
    %28 = arith.addf %22, %27 : vector<4x256xf32>
    %29 = vector.extract_strided_slice %28 {offsets = [0, 0], sizes = [1, 256], strides = [1, 1]} : vector<4x256xf32> to vector<1x256xf32>
    %cst = arith.constant 0.000000e+00 : f32
    %30 = vector.broadcast %cst : f32 to vector<1x256xf32>
    %31 = arith.maximumf %29, %30 : vector<1x256xf32>
    %cst_6 = arith.constant 2.550000e+02 : f32
    %32 = vector.broadcast %cst_6 : f32 to vector<1x256xf32>
    %33 = arith.mulf %31, %32 : vector<1x256xf32>
    %c0_7 = arith.constant 0 : index
    %c0_8 = arith.constant 0 : index
    %34 = vector.load %arg5[%c0_7, %c0_8] : memref<8x1xf32, #tpu.memory_space<vmem>>, vector<8x1xf32>
    %35 = vector.broadcast %34 : vector<8x1xf32> to vector<8x256xf32>
    %36 = vector.broadcast %33 : vector<1x256xf32> to vector<8x256xf32>
    %37 = arith.mulf %35, %36 : vector<8x256xf32>
    %c0_9 = arith.constant 0 : index
    %c0_10 = arith.constant 0 : index
    %38 = vector.load %arg6[%c0_9, %c0_10] : memref<8x1xf32, #tpu.memory_space<vmem>>, vector<8x1xf32>
    %39 = vector.broadcast %38 : vector<8x1xf32> to vector<8x256xf32>
    %40 = arith.addf %37, %39 : vector<8x256xf32>
    %41 = tpu.concatenate %28, %40 in 0 : vector<4x256xf32>, vector<8x256xf32> -> vector<12x256xf32>
    %c0_11 = arith.constant 0 : index
    %c0_12 = arith.constant 0 : index
    %c0_13 = arith.constant 0 : index
    %42 = vector.load %arg7[%c0_11, %c0_12, %c0_13] : memref<1x12x256xf32, #tpu.memory_space<vmem>>, vector<1x12x256xf32>
    %43 = vector.shape_cast %42 : vector<1x12x256xf32> to vector<12x256xf32>
    %44 = vector.shape_cast %41 : vector<12x256xf32> to vector<1x12x256xf32>
    tpu.vector_store %arg7[%c0_11, %c0_12, %c0_13], %44 {strides = array<i32>} : memref<1x12x256xf32, #tpu.memory_space<vmem>>, vector<1x12x256xf32>,
    return
  }
  func.func @transform_0(%arg0: i32, %arg1: i32) -> (i32, i32, i32) {
    %c0_i32 = arith.constant 0 : i32
    %c0_i32_0 = arith.constant 0 : i32
    return %arg0, %c0_i32, %arg1 : i32, i32, i32
  }
  func.func @transform_1(%arg0: i32, %arg1: i32) -> (i32, i32) {
    %c0_i32 = arith.constant 0 : i32
    %c0_i32_0 = arith.constant 0 : i32
    %c0_i32_1 = arith.constant 0 : i32
    return %c0_i32, %c0_i32_0 : i32, i32
  }
  func.func @transform_2(%arg0: i32, %arg1: i32) -> (i32, i32) {
    %c0_i32 = arith.constant 0 : i32
    %c0_i32_0 = arith.constant 0 : i32
    %c0_i32_1 = arith.constant 0 : i32
    return %c0_i32, %c0_i32_0 : i32, i32
  }
  func.func @transform_3(%arg0: i32, %arg1: i32) -> (i32, i32) {
    %c0_i32 = arith.constant 0 : i32
    %c0_i32_0 = arith.constant 0 : i32
    %c0_i32_1 = arith.constant 0 : i32
    return %c0_i32, %c0_i32_0 : i32, i32
  }
  func.func @transform_4(%arg0: i32, %arg1: i32) -> (i32, i32) {
    %c0_i32 = arith.constant 0 : i32
    %c0_i32_0 = arith.constant 0 : i32
    %c0_i32_1 = arith.constant 0 : i32
    return %c0_i32, %c0_i32_0 : i32, i32
  }
  func.func @transform_5(%arg0: i32, %arg1: i32) -> (i32, i32, i32) {
    %c0_i32 = arith.constant 0 : i32
    %c0_i32_0 = arith.constant 0 : i32
    return %arg0, %c0_i32, %arg1 : i32, i32, i32
  }
}

</mosaic_0001>

<llo_original>
// kernel: tpu_custom_call.1
$region0: #{tpu_custom_call.1}
  #allocation0 [shape = 'u32[]', space=smem, size = 0x4, offset = 0x4, fixed_abs, tag = 'smem constant byte address 0x4 - core index']
  #allocation1 [shape = 'u32[72,128]{1,0:T(1,128)}', space=vmem, size = 0x9000, scoped, tag = 'internal scratch']
  %s0 = inlined_call_operand.vmem [shape: f32[2,4,256], index: 0, kind: input, shape index: {}]
  %s1 = inlined_call_operand.vmem [shape: f32[4,4], index: 1, kind: input, shape index: {}]
  %s2 = inlined_call_operand.vmem [shape: f32[4,1], index: 2, kind: input, shape index: {}]
  %s3 = inlined_call_operand.vmem [shape: f32[8,1], index: 3, kind: input, shape index: {}]
  %s4 = inlined_call_operand.vmem [shape: f32[8,1], index: 4, kind: input, shape index: {}]
  %s5 = inlined_call_operand.vmem [shape: f32[2,12,256], index: 5, kind: output, shape index: {}]
  %s6 = sld [smem:[#allocation0]]
  $region53: #{tpu_custom_call.1} parent=0
    _
  %s8 = ssub.s32 1, %s6
  %s9 = scalar_select 0, %s8, %s6
  loop: start=0, step=1, limit=4
  $region2: #{tpu_custom_call.1} parent=0 // loop_pre_header
    _
  $region3: #{tpu_custom_call.1} parent=0 // loop_header
    %s11 = sphi 0, %s15
    %p12 = scmp.ge.s32.totalorder %s11, 4
    %s18 = sphi 0, %s30
    %s19 = sphi 0, %s26
    %s20 = sphi 0, %s18
    %s21 = sphi 0, %s19
    %s22 = sphi 0, %s20
    %s23 = sphi 0, %s21
    %s35 = sphi 0, %s37
    %s38 = sphi 0, %s35
    %s39 = sphi 0, %s38
    %s55 = sphi 0, %s39
    %s59 = sphi 0, %s59
    %s61 = sphi 0, %s59
    %s62 = sphi 0, %s61
    %s76 = sphi 0, %s62
    %s80 = sphi 0, %s80
    %s82 = sphi 0, %s80
    %s83 = sphi 0, %s82
    %s97 = sphi 0, %s83
    %s101 = sphi 0, %s101
    %s103 = sphi 0, %s101
    %s104 = sphi 0, %s103
    %s118 = sphi 0, %s104
    %s122 = sphi 0, %s122
    %s124 = sphi 0, %s122
    %s125 = sphi 0, %s124
    %s139 = sphi 0, %s125
    %s147 = sphi 0, %s149
    %s150 = sphi 0, %s147
    %s151 = sphi 0, %s150
    %s167 = sphi 0, %s151
  $region4: #{tpu_custom_call.1} parent=0 // loop_header_branch
    %14 = sbr.rel (%p12) target = $region8
  $region5: #{tpu_custom_call.1} parent=0 // loop_body
    %s16 = ssub.s32 %s11, 1
    %s17 = ssub.s32 %s11, 2
    %s24 = sadd.s32 1, %s19
    %p25 = scmp.ge.s32.totalorder %s24, 1
    %s26 = scalar_select %p25, 0, %s24
    %s27 = sadd.s32 1, %s18
    %s28 = scalar_select %p25, %s27, %s18
    %p29 = scmp.ge.s32.totalorder %s28, 2
    %s30 = scalar_select %p29, 0, %s28
    %s31 = ssub.s32 %s18, %s30
    %s32 = ssub.s32 %s19, %s26
    %s33 = sor.u32 %s31, %s32
    %p34 = scmp.eq.s32.totalorder %s33, 0
    %s36 = sadd.s32 %s35, 1
    %s37 = scalar_select %p34, %s35, %s36
    %p40 = pneg %p34
    %p41 = scmp.eq.s32.totalorder %s11, 1
    %p42 = por %p40, %p41
    %p43 = scmp.ne.s32.totalorder %s35, %s38
    %p44 = scmp.eq.s32.totalorder %s11, 0
    %p45 = por %p43, %p44
    %p46 = scmp.ne.s32.totalorder %s35, %s38
    %p47 = scmp.eq.s32.totalorder %s16, 1
    %p48 = por %p46, %p47
    %p49 = scmp.ne.s32.totalorder %s38, %s39
    %p50 = scmp.eq.s32.totalorder %s16, 0
    %p51 = por %p49, %p50
    %p52 = scmp.ne.s32.totalorder %s38, %s39
    %p53 = scmp.eq.s32.totalorder %s17, 1
    %p54 = por %p52, %p53
    %p56 = scmp.ne.s32.totalorder %s39, %s55
    %p57 = scmp.eq.s32.totalorder %s17, 0
    %p58 = por %p56, %p57
    %s60 = sadd.s32 %s59, 1
    %p63 = scmp.eq.s32.totalorder %s11, 1
    %p64 = scmp.ne.s32.totalorder %s59, %s61
    %p65 = scmp.eq.s32.totalorder %s11, 0
    %p66 = por %p64, %p65
    %p67 = scmp.ne.s32.totalorder %s59, %s61
    %p68 = scmp.eq.s32.totalorder %s16, 1
    %p69 = por %p67, %p68
    %p70 = scmp.ne.s32.totalorder %s61, %s62
    %p71 = scmp.eq.s32.totalorder %s16, 0
    %p72 = por %p70, %p71
    %p73 = scmp.ne.s32.totalorder %s61, %s62
    %p74 = scmp.eq.s32.totalorder %s17, 1
    %p75 = por %p73, %p74
    %p77 = scmp.ne.s32.totalorder %s62, %s76
    %p78 = scmp.eq.s32.totalorder %s17, 0
    %p79 = por %p77, %p78
    %s81 = sadd.s32 %s80, 1
    %p84 = scmp.eq.s32.totalorder %s11, 1
    %p85 = scmp.ne.s32.totalorder %s80, %s82
    %p86 = scmp.eq.s32.totalorder %s11, 0
    %p87 = por %p85, %p86
    %p88 = scmp.ne.s32.totalorder %s80, %s82
    %p89 = scmp.eq.s32.totalorder %s16, 1
    %p90 = por %p88, %p89
    %p91 = scmp.ne.s32.totalorder %s82, %s83
    %p92 = scmp.eq.s32.totalorder %s16, 0
    %p93 = por %p91, %p92
    %p94 = scmp.ne.s32.totalorder %s82, %s83
    %p95 = scmp.eq.s32.totalorder %s17, 1
    %p96 = por %p94, %p95
    %p98 = scmp.ne.s32.totalorder %s83, %s97
    %p99 = scmp.eq.s32.totalorder %s17, 0
    %p100 = por %p98, %p99
    %s102 = sadd.s32 %s101, 1
    %p105 = scmp.eq.s32.totalorder %s11, 1
    %p106 = scmp.ne.s32.totalorder %s101, %s103
    %p107 = scmp.eq.s32.totalorder %s11, 0
    %p108 = por %p106, %p107
    %p109 = scmp.ne.s32.totalorder %s101, %s103
    %p110 = scmp.eq.s32.totalorder %s16, 1
    %p111 = por %p109, %p110
    %p112 = scmp.ne.s32.totalorder %s103, %s104
    %p113 = scmp.eq.s32.totalorder %s16, 0
    %p114 = por %p112, %p113
    %p115 = scmp.ne.s32.totalorder %s103, %s104
    %p116 = scmp.eq.s32.totalorder %s17, 1
    %p117 = por %p115, %p116
    %p119 = scmp.ne.s32.totalorder %s104, %s118
    %p120 = scmp.eq.s32.totalorder %s17, 0
    %p121 = por %p119, %p120
    %s123 = sadd.s32 %s122, 1
    %p126 = scmp.eq.s32.totalorder %s11, 1
    %p127 = scmp.ne.s32.totalorder %s122, %s124
    %p128 = scmp.eq.s32.totalorder %s11, 0
    %p129 = por %p127, %p128
    %p130 = scmp.ne.s32.totalorder %s122, %s124
    %p131 = scmp.eq.s32.totalorder %s16, 1
    %p132 = por %p130, %p131
    %p133 = scmp.ne.s32.totalorder %s124, %s125
    %p134 = scmp.eq.s32.totalorder %s16, 0
    %p135 = por %p133, %p134
    %p136 = scmp.ne.s32.totalorder %s124, %s125
    %p137 = scmp.eq.s32.totalorder %s17, 1
    %p138 = por %p136, %p137
    %p140 = scmp.ne.s32.totalorder %s125, %s139
    %p141 = scmp.eq.s32.totalorder %s17, 0
    %p142 = por %p140, %p141
    %s143 = ssub.s32 %s18, %s30
    %s144 = ssub.s32 %s19, %s26
    %s145 = sor.u32 %s143, %s144
    %p146 = scmp.eq.s32.totalorder %s145, 0
    %s148 = sadd.s32 %s147, 1
    %s149 = scalar_select %p146, %s147, %s148
    %p152 = pneg %p146
    %p153 = scmp.eq.s32.totalorder %s11, 1
    %p154 = por %p152, %p153
    %p155 = scmp.ne.s32.totalorder %s147, %s150
    %p156 = scmp.eq.s32.totalorder %s11, 0
    %p157 = por %p155, %p156
    %p158 = scmp.ne.s32.totalorder %s147, %s150
    %p159 = scmp.eq.s32.totalorder %s16, 1
    %p160 = por %p158, %p159
    %p161 = scmp.ne.s32.totalorder %s150, %s151
    %p162 = scmp.eq.s32.totalorder %s16, 0
    %p163 = por %p161, %p162
    %p164 = scmp.ne.s32.totalorder %s150, %s151
    %p165 = scmp.eq.s32.totalorder %s17, 1
    %p166 = por %p164, %p165
    %p168 = scmp.ne.s32.totalorder %s151, %s167
    %p169 = scmp.eq.s32.totalorder %s17, 0
    %p170 = por %p168, %p169
    %p171 = scmp.le.s32.totalorder 1, %s11
    %p172 = scmp.lt.s32.totalorder %s11, 3
    %p173 = pnand %p171, %p172
    %p174 = pneg %p173
    // Predicated region
    $region9: #{tpu_custom_call.1} parent=5 // pred_check
      _
    $region10: #{tpu_custom_call.1} parent=5 // pred_check_branch
      %176 = sbr.rel (%p173) target = $region12
    $region11: #{tpu_custom_call.1} parent=5 // pred_region
      %s177 = ssub.s32 %s11, 1
      // Predicated region
      $region13: #{tpu_custom_call.1} parent=11 // pred_check
        %p178 = pneg %p72
      $region14: #{tpu_custom_call.1} parent=11 // pred_check_branch
        %180 = sbr.rel (%p178) target = $region16
      $region15: #{tpu_custom_call.1} parent=11 // pred_region
        _
      $region16: #{tpu_custom_call.1} parent=11 // pred_fallthru
        _
      // Predicated region
      $region17: #{tpu_custom_call.1} parent=11 // pred_check
        %p181 = pneg %p93
      $region18: #{tpu_custom_call.1} parent=11 // pred_check_branch
        %183 = sbr.rel (%p181) target = $region20
      $region19: #{tpu_custom_call.1} parent=11 // pred_region
        _
      $region20: #{tpu_custom_call.1} parent=11 // pred_fallthru
        _
      // Predicated region
      $region21: #{tpu_custom_call.1} parent=11 // pred_check
        %p184 = pneg %p114
      $region22: #{tpu_custom_call.1} parent=11 // pred_check_branch
        %186 = sbr.rel (%p184) target = $region24
      $region23: #{tpu_custom_call.1} parent=11 // pred_region
        _
      $region24: #{tpu_custom_call.1} parent=11 // pred_fallthru
        _
      // Predicated region
      $region25: #{tpu_custom_call.1} parent=11 // pred_check
        %p187 = pneg %p135
      $region26: #{tpu_custom_call.1} parent=11 // pred_check_branch
        %189 = sbr.rel (%p187) target = $region28
      $region27: #{tpu_custom_call.1} parent=11 // pred_region
        _
      $region28: #{tpu_custom_call.1} parent=11 // pred_fallthru
        _
    $region12: #{tpu_custom_call.1} parent=5 // pred_fallthru
      _
    %p190 = scmp.lt.s32.totalorder %s11, 2
    // Predicated region
    $region29: #{tpu_custom_call.1} parent=5 // pred_check
      %p191 = pneg %p190
    $region30: #{tpu_custom_call.1} parent=5 // pred_check_branch
      %193 = sbr.rel (%p191) target = $region32
    $region31: #{tpu_custom_call.1} parent=5 // pred_region
      // Predicated region
      $region33: #{tpu_custom_call.1} parent=31 // pred_check
        %p194 = pneg %p45
      $region34: #{tpu_custom_call.1} parent=31 // pred_check_branch
        %196 = sbr.rel (%p194) target = $region36
      $region35: #{tpu_custom_call.1} parent=31 // pred_region
        %s197 = smul.u32 2, %s19
        %p198 = scmp.lt.s32.totalorder %s18, 1
        %s199 = scalar_select %p198, %s18, 1
        %p200 = scmp.lt.s32.totalorder %s197, 1
        %s201 = scalar_select %p200, %s197, 1
        %s202 = smul.addr %s199, 2
        %s203 = sadd.s32 %s201, %s202
        %s204 = smul.addr %s203, 4
        %s205 = scalar_lea.vmem %s0, %s204
        %s206 = smul.u32 2, %s19
      $region36: #{tpu_custom_call.1} parent=31 // pred_fallthru
        _
    $region32: #{tpu_custom_call.1} parent=5 // pred_fallthru
      _
    %p207 = scmp.le.s32.totalorder 1, %s11
    %p208 = scmp.lt.s32.totalorder %s11, 3
    %p209 = pnand %p207, %p208
    %p210 = pneg %p209
    // Predicated region
    $region37: #{tpu_custom_call.1} parent=5 // pred_check
      _
    $region38: #{tpu_custom_call.1} parent=5 // pred_check_branch
      %212 = sbr.rel (%p209) target = $region40
    $region39: #{tpu_custom_call.1} parent=5 // pred_region
      %s213 = ssub.s32 %s11, 1
      %s214 = smul.u32 2, %s21
      %p215 = scmp.lt.s32.totalorder %s20, 1
      %s216 = scalar_select %p215, %s20, 1
      %p217 = scmp.lt.s32.totalorder %s214, 1
      %s218 = scalar_select %p217, %s214, 1
      %s219 = smul.addr %s216, 2
      %s220 = sadd.s32 %s218, %s219
      %s221 = smul.addr %s220, 4
      %s222 = scalar_lea.vmem %s0, %s221
      %p223 = pneg %p51
      %p224 = pneg %p48
      %p225 = pneg %p72
      %p226 = pneg %p69
      %p227 = pneg %p93
      %p228 = pneg %p90
      %p229 = pneg %p114
      %p230 = pneg %p111
      %p231 = pneg %p135
      %p232 = pneg %p132
      %p233 = pneg %p163
      %p234 = pneg %p160
      %s235 = smul.u32 2, %s21
      %p236 = scmp.lt.s32.totalorder %s20, 1
      %s237 = scalar_select %p236, %s20, 1
      %p238 = scmp.lt.s32.totalorder %s235, 1
      %s239 = scalar_select %p238, %s235, 1
      %s240 = smul.addr %s237, 4
      %s241 = sadd.s32 %s239, %s240
      %s242 = smul.addr %s241, 8
      %s243 = scalar_lea.vmem %s5, %s242
      %s244 = smul.u32 2, %s21
      %p245 = scmp.lt.s32.totalorder %s20, 1
      %s246 = scalar_select %p245, %s20, 1
      %p247 = scmp.lt.s32.totalorder %s244, 1
      %s248 = scalar_select %p247, %s244, 1
      %s249 = smul.addr %s246, 2
      %s250 = sadd.s32 %s248, %s249
      %s251 = smul.addr %s250, 4
      %s252 = scalar_lea.vmem %s0, %s251
      %s253 = smul.u32 2, %s21
      %s254 = smul.u32 2, %s21
      %p255 = scmp.lt.s32.totalorder %s20, 1
      %s256 = scalar_select %p255, %s20, 1
      %p257 = scmp.lt.s32.totalorder %s254, 1
      %s258 = scalar_select %p257, %s254, 1
      %s259 = smul.addr %s256, 4
      %s260 = sadd.s32 %s258, %s259
      %s261 = smul.addr %s260, 8
      %s262 = scalar_lea.vmem %s5, %s261
      %s263 = smul.u32 2, %s21
      %v264 = vld [vmem:[%s252] sm:$0xff]
      %v265 = vld [vmem:[%s1] sm:$0xf]
      %v266 = vld [vmem:[%s2] sm:$0xf]
      %268 = vset.pattern.permute.xlu0 0
      %269 = vperm.xlu0 %268, %v265
      %v270 = vpop.permute.xlu0 %269
      %v273 = vperm.slane %v264, 0
      %v274 = vperm.slane %v264, 4
      %v277 = vperm.slane %v273, 0
      %v278 = vperm.slane %v274, 0
      %v279 = vmul.f32 %v270, %v277
      %v280 = vmul.f32 %v270, %v278
      %282 = vset.pattern.permute.xlu0 0
      %283 = vperm.xlu0 %282, %v266
      %v284 = vpop.permute.xlu0 %283
      %v286 = vadd.f32 %v284, %v279
      %v287 = vadd.f32 %v284, %v280
      %288 = vset.pattern.permute.xlu0 1
      %289 = vperm.xlu0 %288, %v265
      %v290 = vpop.permute.xlu0 %289
      %v292 = vperm.slane %v264, 1
      %v293 = vperm.slane %v264, 5
      %v296 = vperm.slane %v292, 1
      %v297 = vperm.slane %v293, 1
      %v298 = vmul.f32 %v290, %v296
      %v299 = vmul.f32 %v290, %v297
      %v300 = vadd.f32 %v286, %v298
      %v301 = vadd.f32 %v287, %v299
      %302 = vset.pattern.permute.xlu0 2
      %303 = vperm.xlu0 %302, %v265
      %v304 = vpop.permute.xlu0 %303
      %v306 = vperm.slane %v264, 2
      %v307 = vperm.slane %v264, 6
      %v310 = vperm.slane %v306, 2
      %v311 = vperm.slane %v307, 2
      %v312 = vmul.f32 %v304, %v310
      %v313 = vmul.f32 %v304, %v311
      %v314 = vadd.f32 %v300, %v312
      %v315 = vadd.f32 %v301, %v313
      %316 = vset.pattern.permute.xlu0 3
      %317 = vperm.xlu0 %316, %v265
      %v318 = vpop.permute.xlu0 %317
      %v320 = vperm.slane %v264, 3
      %v321 = vperm.slane %v264, 7
      %v324 = vperm.slane %v320, 3
      %v325 = vperm.slane %v321, 3
      %v326 = vmul.f32 %v318, %v324
      %v327 = vmul.f32 %v318, %v325
      %v328 = vadd.f32 %v314, %v326
      %v329 = vadd.f32 %v315, %v327
      %v330 = vmax.f32 %v328, 0.0
      %v331 = vmax.f32 %v329, 0.0
      %v332 = vmul.f32 %v330, 255.0
      %v333 = vmul.f32 %v331, 255.0
      %v334 = vld [vmem:[%s3] sm:$0xff]
      %336 = vset.pattern.permute.xlu0 0
      %337 = vperm.xlu0 %336, %v334
      %v338 = vpop.permute.xlu0 %337
      %v340 = vperm.slane %v332, 0
      %v341 = vperm.slane %v333, 0
      %v342 = vmul.f32 %v338, %v340
      %v343 = vmul.f32 %v338, %v341
      %v344 = vld [vmem:[%s4] sm:$0xff]
      %346 = vset.pattern.permute.xlu0 0
      %347 = vperm.xlu0 %346, %v344
      %v348 = vpop.permute.xlu0 %347
      %v350 = vadd.f32 %v342, %v348
      %v351 = vadd.f32 %v343, %v348
      %v354 = vrot.slane %v350, 4
      %v355 = vrot.slane %v351, 4
      %vm358 = vcmask 1043456
      %v359 = vsel %vm358, %v328, %v354
      %v360 = vsel %vm358, %v329, %v355
      %361 = vst [vmem:[%s262] sm:$0xff] %v359
      %362 = vst [vmem:[%s262 + $0x8] sm:$0xff] %v360
      %363 = vst [vmem:[%s262 + $0x10] sm:$0xf] %v354
      %364 = vst [vmem:[%s262 + $0x18] sm:$0xf] %v355
      %s365 = smul.u32 2, %s21
      %p366 = scmp.lt.s32.totalorder %s20, 1
      %s367 = scalar_select %p366, %s20, 1
      %p368 = scmp.lt.s32.totalorder %s365, 1
      %s369 = scalar_select %p368, %s365, 1
      %s370 = smul.addr %s367, 4
      %s371 = sadd.s32 %s369, %s370
      %s372 = smul.addr %s371, 8
      %s373 = scalar_lea.vmem %s5, %s372
      // Predicated region
      $region41: #{tpu_custom_call.1} parent=39 // pred_check
        %p374 = pneg %p160
      $region42: #{tpu_custom_call.1} parent=39 // pred_check_branch
        %376 = sbr.rel (%p374) target = $region44
      $region43: #{tpu_custom_call.1} parent=39 // pred_region
        %s377 = smul.u32 2, %s21
      $region44: #{tpu_custom_call.1} parent=39 // pred_fallthru
        _
    $region40: #{tpu_custom_call.1} parent=5 // pred_fallthru
      _
    %p378 = scmp.le.s32.totalorder 2, %s11
    // Predicated region
    $region45: #{tpu_custom_call.1} parent=5 // pred_check
      %p379 = pneg %p378
    $region46: #{tpu_custom_call.1} parent=5 // pred_check_branch
      %381 = sbr.rel (%p379) target = $region48
    $region47: #{tpu_custom_call.1} parent=5 // pred_region
      %s382 = ssub.s32 %s11, 2
      // Predicated region
      $region49: #{tpu_custom_call.1} parent=47 // pred_check
        %p383 = pneg %p166
      $region50: #{tpu_custom_call.1} parent=47 // pred_check_branch
        %385 = sbr.rel (%p383) target = $region52
      $region51: #{tpu_custom_call.1} parent=47 // pred_region
        %s386 = smul.u32 2, %s23
        %p387 = scmp.lt.s32.totalorder %s22, 1
        %s388 = scalar_select %p387, %s22, 1
        %p389 = scmp.lt.s32.totalorder %s386, 1
        %s390 = scalar_select %p389, %s386, 1
        %s391 = smul.addr %s388, 4
        %s392 = sadd.s32 %s390, %s391
        %s393 = smul.addr %s392, 8
        %s394 = scalar_lea.vmem %s5, %s393
      $region52: #{tpu_custom_call.1} parent=47 // pred_fallthru
        _
    $region48: #{tpu_custom_call.1} parent=5 // pred_fallthru
      _
  $region6: #{tpu_custom_call.1} parent=0 // loop_footer
    %s15 = sadd.s32 1, %s11
  $region7: #{tpu_custom_call.1} parent=0 // loop_footer_branch
    %10 = sbr.rel target = $region3
  $region8: #{tpu_custom_call.1} parent=0 // loop_exit
    _

</llo_original>
